<compile_context>
chip_gen: v7x
topology: tpu7x:2x2x1
jax: 0.10.0
libtpu: 0.0.40
codegen_flags: <defaults>
</compile_context>

<pallas_src>
import jax
import jax.numpy as jnp
from jax import lax
from jax.experimental import pallas as pl
from jax.experimental.pallas import tpu as pltpu

_LANES = 128  # pad the 2-column head output to a full lane register -> unmasked stores


def _round_up(n, m):
    return ((n + m - 1) // m) * m


def _regclass_fused_kernel(x_ref, w_ref, b_ref, out_ref):
    """x_ref: (TB, D_in); w_ref: (D_in, 128); b_ref: (1, 128); out_ref: (TB, 128).

    Column 0 of the output is the regressor head, column 1 is sigmoid(classifier
    head); remaining columns are zero padding.
    """
    x = x_ref[...]
    # Single fused affine map on the MXU, f32 accumulation.
    y = jnp.dot(x, w_ref[...], preferred_element_type=jnp.float32)
    y = y + b_ref[...]                       # f32 bias add on the VPU
    # Apply sigmoid only to the classifier column (column 1).
    col = lax.broadcasted_iota(jnp.int32, y.shape, 1)
    y = jnp.where(col == 1, jax.nn.sigmoid(y), y)
    out_ref[...] = y.astype(out_ref.dtype)


def _fold_params(params):
    """Fold the purely-affine encoder + both heads into W_eff [D_in, 128], b_eff [1, 128]."""
    w1, b1 = params["w1"], params["b1"]
    w2, b2 = params["w2"], params["b2"]
    w3, b3 = params["w3"], params["b3"]
    w_heads = jnp.concatenate([params["wr"], params["wc"]], axis=1)  # [latent, 2]
    b_heads = jnp.concatenate([params["br"], params["bc"]], axis=1)  # [1, 2]

    w_enc = w1 @ w2 @ w3                           # [D_in, latent]
    b_enc = ((b1 @ w2) + b2) @ w3 + b3             # [1, latent]
    w_eff = w_enc @ w_heads                        # [D_in, 2]
    b_eff = b_enc @ w_heads + b_heads              # [1, 2]

    pad = _LANES - w_eff.shape[1]
    w_eff = jnp.pad(w_eff, ((0, 0), (0, pad)))     # [D_in, 128]
    b_eff = jnp.pad(b_eff, ((0, 0), (0, pad)))     # [1, 128]
    return w_eff, b_eff


def regclass_forward(x, params, *, batch_tile=512, use_bf16=False):
    """x: [B, input_dim] float32. Returns (reg [B,1], cls [B,1]) in float32."""
    B, D_in = x.shape
    w_eff, b_eff = _fold_params(params)

    if use_bf16:
        # bf16 feeds the native MXU path on all generations; bias/sigmoid stay f32.
        x = x.astype(jnp.bfloat16)
        w_eff = w_eff.astype(jnp.bfloat16)

    sublane = 16 if use_bf16 else 8
    tb = max(sublane, min(batch_tile, _round_up(B, sublane)))
    tb = _round_up(tb, sublane)
    b_padded = _round_up(B, tb)
    if b_padded != B:
        x = jnp.pad(x, ((0, b_padded - B), (0, 0)))

    grid = (b_padded // tb,)

    out = pl.pallas_call(
        _regclass_fused_kernel,
        grid=grid,
        in_specs=[
            # Batch-tiled activations.
            pl.BlockSpec((tb, D_in), lambda i: (i, 0)),
            # Weights / bias: constant index_map -> stay VMEM-resident across steps.
            pl.BlockSpec((w_eff.shape[0], _LANES), lambda i: (0, 0)),
            pl.BlockSpec((1, _LANES), lambda i: (0, 0)),
        ],
        out_specs=pl.BlockSpec((tb, _LANES), lambda i: (i, 0)),
        out_shape=jax.ShapeDtypeStruct((b_padded, _LANES), jnp.float32),
        compiler_params=pltpu.CompilerParams(
            dimension_semantics=("parallel",)),  # shards batch across v7x's 2 TCs
    )(x, w_eff, b_eff)

    reg = out[:B, 0:1]
    cls = out[:B, 1:2]
    return reg, cls


def init_params(key, input_dim, latent_dim):
    """Deterministic init. Encoder dims follow the PyTorch constructor for
    encoder_depth=2: D -> D/2 -> D/4 -> latent (requires D//4 > latent).
    Linear weights are stored pre-transposed as [in_features, out_features]."""
    d0, d1, d2 = input_dim, input_dim // 2, input_dim // 4
    assert d2 > latent_dim, "encoder_depth=2 path requires input_dim//4 > latent_dim"

    def linear(key, fan_in, fan_out):
        # torch.nn.Linear default init: U(-1/sqrt(fan_in), 1/sqrt(fan_in))
        kw, kb = jax.random.split(key)
        bound = 1.0 / jnp.sqrt(fan_in)
        w = jax.random.uniform(kw, (fan_in, fan_out), jnp.float32, -bound, bound)
        b = jax.random.uniform(kb, (1, fan_out), jnp.float32, -bound, bound)
        return w, b

    k1, k2, k3, kr, kc = jax.random.split(key, 5)
    w1, b1 = linear(k1, d0, d1)
    w2, b2 = linear(k2, d1, d2)
    w3, b3 = linear(k3, d2, latent_dim)
    wr, br = linear(kr, latent_dim, 1)
    wc, bc = linear(kc, latent_dim, 1)
    return dict(w1=w1, b1=b1, w2=w2, b2=b2, w3=w3, b3=b3,
                wr=wr, br=br, wc=wc, bc=bc)


def reference_forward(x, p):
    """Layer-by-layer pure-JAX reference matching the PyTorch forward."""
    z = x @ p["w1"] + p["b1"]
    z = z @ p["w2"] + p["b2"]
    z = z @ p["w3"] + p["b3"]
    reg = z @ p["wr"] + p["br"]
    cls = jax.nn.sigmoid(z @ p["wc"] + p["bc"])
    return reg, cls


if __name__ == "__main__":
    B, INPUT_DIM, LATENT_DIM = 8, 32, 4

    key = jax.random.PRNGKey(0)
    kx, kp = jax.random.split(key)
    x = jax.random.normal(kx, (B, INPUT_DIM), jnp.float32)
    params = init_params(kp, INPUT_DIM, LATENT_DIM)

    reg, cls = regclass_forward(x, params)
    reg = jax.block_until_ready(reg)
    cls = jax.block_until_ready(cls)

    reg_ref, cls_ref = reference_forward(x, params)
    assert reg.shape == (B, 1) and cls.shape == (B, 1)
    assert jnp.allclose(reg, reg_ref, atol=1e-5, rtol=1e-5)
    assert jnp.allclose(cls, cls_ref, atol=1e-5, rtol=1e-5)

    print("KERNEL_OK")
</pallas_src>

<mosaic_0001>
module attributes {stable_mosaic.version = 11 : i64} {
  func.func @_regclass_fused_kernel(%arg0: i32, %arg1: memref<8x32xf32, #tpu.memory_space<vmem>>, %arg2: memref<32x128xf32, #tpu.memory_space<vmem>>, %arg3: memref<1x128xf32, #tpu.memory_space<vmem>>, %arg4: memref<8x128xf32, #tpu.memory_space<vmem>>) attributes {dimension_semantics = [#tpu.dimension_semantics<parallel>], iteration_bounds = array<i64: 1>, scalar_prefetch = 0 : i64, scratch_operands = 0 : i64, tpu.core_type = #tpu.core_type<tc>, window_params = [{transform_indices = @transform_0, window_bounds = array<i64: 8, 32>}, {pipeline_mode = #tpu.pipeline_mode<synchronous>, transform_indices = @transform_1, window_bounds = array<i64: 32, 128>}, {pipeline_mode = #tpu.pipeline_mode<synchronous>, transform_indices = @transform_2, window_bounds = array<i64: 1, 128>}, {transform_indices = @transform_3, window_bounds = array<i64: 8, 128>}]} {
    %c0 = arith.constant 0 : index
    %c0_0 = arith.constant 0 : index
    %0 = vector.load %arg1[%c0, %c0_0] : memref<8x32xf32, #tpu.memory_space<vmem>>, vector<8x32xf32>
    %c0_1 = arith.constant 0 : index
    %c0_2 = arith.constant 0 : index
    %1 = vector.load %arg2[%c0_1, %c0_2] : memref<32x128xf32, #tpu.memory_space<vmem>>, vector<32x128xf32>
    %cst = arith.constant dense<0.000000e+00> : vector<8x128xf32>
    %2 = tpu.matmul %0, %1, %cst {dimension_numbers = #tpu.dot_dimension_numbers<[1], [0], [0], [1], [0, 0, 1, 1], [], []>} : vector<8x32xf32>, vector<32x128xf32>, vector<8x128xf32> -> vector<8x128xf32>
    %c0_3 = arith.constant 0 : index
    %c0_4 = arith.constant 0 : index
    %3 = vector.load %arg3[%c0_3, %c0_4] : memref<1x128xf32, #tpu.memory_space<vmem>>, vector<1x128xf32>
    %4 = vector.broadcast %3 : vector<1x128xf32> to vector<8x128xf32>
    %5 = arith.addf %2, %4 : vector<8x128xf32>
    %6 = tpu.iota {dimensions = array<i32: 1>} : vector<8x128xi32>
    %c1_i32 = arith.constant 1 : i32
    %7 = vector.broadcast %c1_i32 : i32 to vector<8x128xi32>
    %8 = arith.cmpi eq, %6, %7 : vector<8x128xi32>
    %9 = arith.negf %5 : vector<8x128xf32>
    %10 = math.exp %9 : vector<8x128xf32>
    %cst_5 = arith.constant 1.000000e+00 : f32
    %11 = vector.broadcast %cst_5 : f32 to vector<8x128xf32>
    %12 = arith.addf %11, %10 : vector<8x128xf32>
    %13 = arith.divf %11, %12 : vector<8x128xf32>
    %14 = arith.select %8, %13, %5 : vector<8x128xi1>, vector<8x128xf32>
    %c0_6 = arith.constant 0 : index
    %c0_7 = arith.constant 0 : index
    %15 = vector.load %arg4[%c0_6, %c0_7] : memref<8x128xf32, #tpu.memory_space<vmem>>, vector<8x128xf32>
    tpu.vector_store %arg4[%c0_6, %c0_7], %14 {strides = array<i32>} : memref<8x128xf32, #tpu.memory_space<vmem>>, vector<8x128xf32>,
    return
  }
  func.func @transform_0(%arg0: i32) -> (i32, i32) {
    %c0_i32 = arith.constant 0 : i32
    %c0_i32_0 = arith.constant 0 : i32
    return %arg0, %c0_i32 : i32, i32
  }
  func.func @transform_1(%arg0: i32) -> (i32, i32) {
    %c0_i32 = arith.constant 0 : i32
    %c0_i32_0 = arith.constant 0 : i32
    %c0_i32_1 = arith.constant 0 : i32
    return %c0_i32, %c0_i32_0 : i32, i32
  }
  func.func @transform_2(%arg0: i32) -> (i32, i32) {
    %c0_i32 = arith.constant 0 : i32
    %c0_i32_0 = arith.constant 0 : i32
    %c0_i32_1 = arith.constant 0 : i32
    return %c0_i32, %c0_i32_0 : i32, i32
  }
  func.func @transform_3(%arg0: i32) -> (i32, i32) {
    %c0_i32 = arith.constant 0 : i32
    %c0_i32_0 = arith.constant 0 : i32
    return %arg0, %c0_i32 : i32, i32
  }
}

</mosaic_0001>

<llo_original>
// kernel: tpu_custom_call.1
$region0: #{tpu_custom_call.1}
  #allocation0 [shape = 'u32[]', space=smem, size = 0x4, offset = 0x4, fixed_abs, tag = 'smem constant byte address 0x4 - core index']
  #allocation1 [shape = 'u32[144,128]{1,0:T(1,128)}', space=vmem, size = 0x12000, scoped, tag = 'internal scratch']
  %s0 = inlined_call_operand.hbm [shape: f32[8,32], index: 0, kind: input, shape index: {}]
  %s1 = inlined_call_operand.hbm [shape: f32[32,128], index: 1, kind: input, shape index: {}]
  %s2 = inlined_call_operand.vmem [shape: f32[1,128], index: 2, kind: input, shape index: {}]
  %s3 = inlined_call_operand.hbm [shape: f32[8,128], index: 3, kind: output, shape index: {}]
  %s4 = sld [smem:[#allocation0]]
  $region30: #{tpu_custom_call.1} parent=0
    _
  %s6 = ssub.s32 1, %s4
  %s7 = scalar_select 0, %s6, %s4
  $region1: #{tpu_custom_call.1} parent=0
    #allocation2 [shape = 'u8[4096]{0}', space=vmem, size = 0x1000, scoped, tag = 'input window, operand 0, single buffered']
    #allocation3 [shape = 's32[1]{0}', space=sflag, size = 0x4, scoped, tag = 'scoped memory for tpu_custom_call.1']
    #allocation4 [shape = 's32[1]{0}', space=sflag, size = 0x4, scoped, tag = 'scoped memory for tpu_custom_call.1']
    #allocation5 [shape = 'u8[16384]{0}', space=vmem, size = 0x4000, scoped, tag = 'input window, operand 1, single buffered']
    #allocation6 [shape = 's32[1]{0}', space=sflag, size = 0x4, scoped, tag = 'scoped memory for tpu_custom_call.1']
    #allocation7 [shape = 'u8[4096]{0}', space=vmem, size = 0x1000, scoped, tag = 'output window, operand 0, single buffered']
    %8 = vsyncpa [#allocation3], 0
    %9 = vsyncpa [#allocation6], 0
    %10 = vsyncpa [#allocation4], 0
    // Predicated region
    $region2: #{tpu_custom_call.1} parent=1 // pred_check
      _
    $region3: #{tpu_custom_call.1} parent=1 // pred_check_branch
      %12 = sbr.rel (0) target = $region5
    $region4: #{tpu_custom_call.1} parent=1 // pred_region
      %s14 = ssub.s32 128, 128
      %15 = vsyncadd [#allocation3], %s14
      %s17 = sshll.u32 [#allocation2], 4
      %s18 = int_to_ptr.vmem [resolvable:$true] %s17
      %20 = dma.hbm_to_vmem [thread:$0]  %s0, 128, %s18, [#allocation3]
    $region5: #{tpu_custom_call.1} parent=1 // pred_fallthru
      _
    // Predicated region
    $region6: #{tpu_custom_call.1} parent=1 // pred_check
      _
    $region7: #{tpu_custom_call.1} parent=1 // pred_check_branch
      %22 = sbr.rel (0) target = $region9
    $region8: #{tpu_custom_call.1} parent=1 // pred_region
      %s24 = ssub.s32 512, 512
      %25 = vsyncadd [#allocation6], %s24
      %s26 = sshll.u32 [#allocation5], 4
      %s27 = int_to_ptr.vmem [resolvable:$true] %s26
      %32 = dma.hbm_to_vmem [thread:$0]  %s1, 512, %s27, [#allocation6], 128, 128, 8
    $region9: #{tpu_custom_call.1} parent=1 // pred_fallthru
      _
    // Predicated region
    $region10: #{tpu_custom_call.1} parent=1 // pred_check
      _
    $region11: #{tpu_custom_call.1} parent=1 // pred_check_branch
      %34 = sbr.rel (0) target = $region13
    $region12: #{tpu_custom_call.1} parent=1 // pred_region
      _
    $region13: #{tpu_custom_call.1} parent=1 // pred_fallthru
      _
    // Predicated region
    $region14: #{tpu_custom_call.1} parent=1 // pred_check
      _
    $region15: #{tpu_custom_call.1} parent=1 // pred_check_branch
      %36 = sbr.rel (0) target = $region17
    $region16: #{tpu_custom_call.1} parent=1 // pred_region
      %37 = dma.done [#allocation3], 128
    $region17: #{tpu_custom_call.1} parent=1 // pred_fallthru
      _
    // Predicated region
    $region18: #{tpu_custom_call.1} parent=1 // pred_check
      _
    $region19: #{tpu_custom_call.1} parent=1 // pred_check_branch
      %39 = sbr.rel (0) target = $region21
    $region20: #{tpu_custom_call.1} parent=1 // pred_region
      %40 = dma.done [#allocation6], 512
    $region21: #{tpu_custom_call.1} parent=1 // pred_fallthru
      _
    %v41 = vld [vmem:[#allocation2] sm:$0xff]
    %v42 = vld [vmem:[#allocation5] sm:$0xff]
    %v43 = vld [vmem:[#allocation5 + $0x8] sm:$0xff]
    %v44 = vld [vmem:[#allocation5 + $0x10] sm:$0xff]
    %v45 = vld [vmem:[#allocation5 + $0x18] sm:$0xff]
    %v46 = vld [vmem:[%s2] sm:$0x1]
    %v48 = vlaneseq
    %v49 = vshrl.u32 %v48, 7
    %v50 = vsub.s32 0, %v49
    %v51 = vrot.slane %v46, %v50
    %vm53 = vcmask 261120
    %v55 = vsel %vm53, %v41, 0
    %57 = vmatprep.subr.mxu0 0.0
    %58 = vmatpush1.msra.mxu0 %v42
    %59 = vmatprep.subr.mxu0 0.0
    %60 = vmatpush1.msra.mxu0 %v43
    %61 = vmatprep.subr.mxu0 0.0
    %62 = vmatpush1.msra.mxu0 %v44
    %63 = vmatprep.subr.mxu0 0.0
    %64 = vmatpush1.msra.mxu0 %v45
    %65 = vmatprep.subr.mxu0 0.0
    %66 = vmatpush1.msra.mxu0 0.0
    %67 = vmatprep.subr.mxu0 0.0
    %68 = vmatpush1.msra.mxu0 0.0
    %69 = vmatprep.subr.mxu0 0.0
    %70 = vmatpush1.msra.mxu0 0.0
    %71 = vmatprep.subr.mxu0 0.0
    %72 = vmatpush1.msra.mxu0 0.0
    %73 = vmatprep.subr.mxu0 0.0
    %74 = vmatpush1.msra.mxu0 0.0
    %75 = vmatprep.subr.mxu0 0.0
    %76 = vmatpush1.msra.mxu0 0.0
    %77 = vmatprep.subr.mxu0 0.0
    %78 = vmatpush1.msra.mxu0 0.0
    %79 = vmatprep.subr.mxu0 0.0
    %80 = vmatpush1.msra.mxu0 0.0
    %81 = vmatprep.subr.mxu0 0.0
    %82 = vmatpush1.msra.mxu0 0.0
    %83 = vmatprep.subr.mxu0 0.0
    %84 = vmatpush1.msra.mxu0 0.0
    %85 = vmatprep.subr.mxu0 0.0
    %86 = vmatpush1.msra.mxu0 0.0
    %87 = vmatprep.subr.mxu0 0.0
    %88 = vmatpush1.msra.mxu0 0.0
    %89 = vmatprep.subr.mxu0 0.0
    %90 = vmatpush1.msra.mxu0 0.0
    %91 = vmatprep.subr.mxu0 0.0
    %92 = vmatpush1.msra.mxu0 0.0
    %93 = vmatprep.subr.mxu0 0.0
    %94 = vmatpush1.msra.mxu0 0.0
    %95 = vmatprep.subr.mxu0 0.0
    %96 = vmatpush1.msra.mxu0 0.0
    %97 = vmatprep.subr.mxu0 0.0
    %98 = vmatpush1.msra.mxu0 0.0
    %99 = vmatprep.subr.mxu0 0.0
    %100 = vmatpush1.msra.mxu0 0.0
    %101 = vmatprep.subr.mxu0 0.0
    %102 = vmatpush1.msra.mxu0 0.0
    %103 = vmatprep.subr.mxu0 0.0
    %104 = vmatpush1.msra.mxu0 0.0
    %105 = vmatprep.subr.mxu0 0.0
    %106 = vmatpush1.msra.mxu0 0.0
    %107 = vmatprep.subr.mxu0 0.0
    %108 = vmatpush1.msra.mxu0 0.0
    %109 = vmatprep.subr.mxu0 0.0
    %110 = vmatpush1.msra.mxu0 0.0
    %111 = vmatprep.subr.mxu0 0.0
    %112 = vmatpush1.msra.mxu0 0.0
    %113 = vmatprep.subr.mxu0 0.0
    %114 = vmatpush1.msra.mxu0 0.0
    %115 = vmatprep.subr.mxu0 0.0
    %116 = vmatpush1.msra.mxu0 0.0
    %117 = vmatprep.subr.mxu0 0.0
    %118 = vmatpush1.msra.mxu0 0.0
    %119 = vmatprep.subr.mxu0 0.0
    %120 = vmatpush1.msra.mxu0 0.0
    %121 = vmatprep.mubr.f32.mxu0 0.0
    %122 = vmatmul.mubr.f32.gmra.mrb[0].mxu0 %v55
    %v123 = vpop.f32.mrb[0].mxu0
    %v124 = vadd.f32 %v51, %v123
    %v125 = vpop.f32.mrb[0].mxu0
    %126 = vdwg.mxu0
    %v127 = vlaneseq
    %v128 = vand.u32 %v127, 127
    %vm129 = vcmp.eq.s32.totalorder %v128, 1
    %v130 = vxor.u32 %v124, 2147483648
    %v131 = vmul.f32 %v130, 1.442695
    %v132 = vpow.pop %v131
    %v133 = vadd.f32 %v132, 1.0
    %v134 = vrcp.pop %v133
    %v135 = vmul.f32 1.0, %v134
    %v136 = vsel %vm129, %v135, %v124
    %137 = vst [vmem:[#allocation7] sm:$0xff] %v136
    // Predicated region
    $region22: #{tpu_custom_call.1} parent=1 // pred_check
      _
    $region23: #{tpu_custom_call.1} parent=1 // pred_check_branch
      %139 = sbr.rel (0) target = $region25
    $region24: #{tpu_custom_call.1} parent=1 // pred_region
      %s141 = ssub.s32 128, 128
      %142 = vsyncadd [#allocation4], %s141
      %s144 = sshll.u32 [#allocation7], 4
      %s145 = int_to_ptr.vmem [resolvable:$true] %s144
      %147 = dma.vmem_to_hbm [thread:$0]  %s145, 128, %s3, [#allocation4]
    $region25: #{tpu_custom_call.1} parent=1 // pred_fallthru
      _
    // Predicated region
    $region26: #{tpu_custom_call.1} parent=1 // pred_check
      _
    $region27: #{tpu_custom_call.1} parent=1 // pred_check_branch
      %149 = sbr.rel (0) target = $region29
    $region28: #{tpu_custom_call.1} parent=1 // pred_region
      %150 = dma.done [#allocation4], 128
    $region29: #{tpu_custom_call.1} parent=1 // pred_fallthru
      _
    %151 = vsyncpa [#allocation3], 1
    %152 = vsyncpa [#allocation6], 1
    %153 = vsyncpa [#allocation4], 1

</llo_original>
